<compile_context>
chip_gen: v7x
topology: tpu7x:2x2x1
jax: 0.10.0
libtpu: 0.0.40
codegen_flags: <defaults>
</compile_context>

<pallas_src>
import functools
import math

import jax
import jax.numpy as jnp
from jax.experimental import pallas as pl
from jax.experimental.pallas import tpu as pltpu


# ----------------------------- kernels ---------------------------------------


def _pe_tile_f32(ts, lanes, d_model, fold, pos0):
    """Sinusoidal PE tile of shape (1, ts, lanes) in f32.  lanes == fold * d_model."""
    lane = jax.lax.broadcasted_iota(jnp.int32, (1, 1, lanes), 2)
    if fold > 1:
        # fold > 1 only when d_model is a power of two (a divisor of 128) -> bit tricks are exact.
        shift = d_model.bit_length() - 1
        j = jnp.bitwise_and(lane, d_model - 1)                       # feature index within d_model
        sub = jnp.right_shift(lane, shift).astype(jnp.float32)       # position within the folded group
    else:
        j = lane
        sub = None
    parity = jnp.bitwise_and(j, 1)                                   # 0 even / 1 odd feature
    j_even = (j - parity).astype(jnp.float32)                        # 2 * (j // 2)
    # div_term = exp(-(ln(10000)/d_model) * 2*(j//2))  -- only `lanes` exp calls per tile
    div_term = jnp.exp(j_even * jnp.float32(-(math.log(10000.0) / d_model)))
    # cos(x) == sin(x + pi/2): fold the even/odd select into a phase offset (1 transcendental/elem)
    phase = parity.astype(jnp.float32) * jnp.float32(math.pi / 2.0)

    p = jax.lax.broadcasted_iota(jnp.int32, (1, ts, 1), 1).astype(jnp.float32)
    pos = pos0 + p                                                   # folded-row position
    if fold > 1:
        pos = pos * jnp.float32(fold) + sub                          # actual sequence position

    return jnp.sin(pos * div_term + phase)                          # (1, ts, lanes)


def _pe_add_kernel(x_ref, o_ref, *, d_model, fold):
    """In-kernel PE recompute + add.  Block: (TB, TS, L)."""
    _, ts, lanes = x_ref.shape
    pos0 = (pl.program_id(1) * ts).astype(jnp.float32)               # seq-tile offset (axis 1 = seq)
    pe = _pe_tile_f32(ts, lanes, d_model, fold, pos0)
    if jnp.dtype(o_ref.dtype) == jnp.dtype(jnp.bfloat16):
        # bf16-native VALU on v6e/v7x: one add per element, half the vreg pressure.
        o_ref[...] = x_ref[...] + pe.astype(jnp.bfloat16)
    else:
        o_ref[...] = (x_ref[...].astype(jnp.float32) + pe).astype(o_ref.dtype)


def _pe_table_add_kernel(x_ref, pe_ref, o_ref):
    """Broadcast add of a precomputed PE table (small-batch path): (TB,TS,L) + (TS,L)."""
    o_ref[...] = (x_ref[...] + pe_ref[...]).astype(o_ref.dtype)


# ----------------------------- wrapper helpers --------------------------------


def _vmem_budget():
    """(target_block_bytes, vmem_limit_bytes), generation-aware (v7x has 64 MiB VMEM per TC)."""
    vmem_bytes = None
    try:
        info = pltpu.get_tpu_info()
        vmem_bytes = getattr(info, "vmem_capacity_bytes", None)
    except Exception:
        vmem_bytes = None
    if vmem_bytes is None:
        vmem_bytes = 64 * 1024 * 1024                 # conservative: assume smallest (v7x-class) VMEM
    if vmem_bytes >= 100 * 1024 * 1024:               # v5e / v6e: 128 MiB physical
        return 16 * 1024 * 1024, 80 * 1024 * 1024     # 4 double-buffered 16 MiB blocks + headroom
    return 7 * 1024 * 1024, 44 * 1024 * 1024          # v7x: keep full pipelining within 64 MiB


def _sublane_granularity(dtype):
    itemsize = jnp.dtype(dtype).itemsize
    if itemsize >= 4:
        return 8
    if itemsize == 2:
        return 16
    return 32


def _fold_factor(s, d):
    """Fold 128//d consecutive positions into the lane dim when d < 128 (lane-dense stores)."""
    if d < 128 and 128 % d == 0 and s % (128 // d) == 0:
        return 128 // d
    return 1


def _pick_seq_tile(s_rows, row_bytes, target_block_bytes, gran):
    """Largest gran-multiple seq tile that fits the byte budget and leaves >= 2 grid steps."""
    if s_rows <= gran:
        return int(s_rows)                                   # full-extent tile (== array dim: legal)
    budget_rows = (target_block_bytes // row_bytes) // gran * gran
    two_step_rows = ((s_rows - 1) // gran) * gran            # largest gran-multiple < s_rows
    return int(max(gran, min(budget_rows, two_step_rows)))


def _pe_table_f32(s, d):
    """Full (S, D) sinusoidal table, same formula as the kernel (for the small-batch path)."""
    j = jnp.arange(d, dtype=jnp.int32)[None, :]
    parity = jnp.bitwise_and(j, 1)
    j_even = (j - parity).astype(jnp.float32)
    div_term = jnp.exp(j_even * jnp.float32(-(math.log(10000.0) / d)))
    phase = parity.astype(jnp.float32) * jnp.float32(math.pi / 2.0)
    pos = jnp.arange(s, dtype=jnp.float32)[:, None]
    return jnp.sin(pos * div_term + phase)


# ----------------------------- public entry point -----------------------------


def positional_encoding(x, *, target_block_bytes=None, vmem_limit_bytes=None,
                        precompute_pe_max_batch=2, donate_x=False):
    """x: (B, S, D) float array. Returns x + sinusoidal positional encoding, same shape/dtype."""
    assert x.ndim == 3, "expected (batch, seq_length, d_model)"
    b, s, d = x.shape
    itemsize = jnp.dtype(x.dtype).itemsize

    auto_block, auto_vmem = _vmem_budget()
    if target_block_bytes is None:
        target_block_bytes = auto_block
    if vmem_limit_bytes is None:
        vmem_limit_bytes = auto_vmem

    # Lane-dense folding for narrow models (D < 128): free row-major reshape in the wrapper.
    fold = _fold_factor(s, d)
    s_rows, lanes = s // fold, d * fold
    xr = x.reshape(b, s_rows, lanes) if fold > 1 else x

    gran = _sublane_granularity(x.dtype)
    row_bytes = b * lanes * itemsize
    min_ts = min(s_rows, gran)
    if b == 1 or min_ts * row_bytes <= target_block_bytes:
        tb = b                                               # whole batch per tile: amortizes sin
        ts = _pick_seq_tile(s_rows, row_bytes, target_block_bytes, gran)
    else:
        ts = min_ts                                          # huge batch: tile the batch instead
        tb = int(min(b, max(1, target_block_bytes // (ts * lanes * itemsize))))
    grid = (pl.cdiv(b, tb), pl.cdiv(s_rows, ts))             # boundary tiles handled by Pallas

    x_spec = pl.BlockSpec((tb, ts, lanes), lambda bi, si: (bi, si, 0))
    out_shape = jax.ShapeDtypeStruct((b, s_rows, lanes), x.dtype)
    compiler_params = pltpu.CompilerParams(
        dimension_semantics=("parallel", "parallel"),
        vmem_limit_bytes=int(vmem_limit_bytes),
    )
    io_alias = {0: 0} if donate_x else {}

    if b <= precompute_pe_max_batch:
        # Small batch: VPU-lowered sin per output element could bind on v7x -> stream a
        # precomputed PE table instead (pure broadcast add; table is compile-time constant).
        pe_dtype = jnp.bfloat16 if jnp.dtype(x.dtype) == jnp.dtype(jnp.bfloat16) else jnp.float32
        pe = _pe_table_f32(s, d).astype(pe_dtype).reshape(s_rows, lanes)
        out = pl.pallas_call(
            _pe_table_add_kernel,
            out_shape=out_shape,
            grid=grid,
            in_specs=[x_spec, pl.BlockSpec((ts, lanes), lambda bi, si: (si, 0))],
            out_specs=x_spec,
            input_output_aliases=io_alias,
            compiler_params=compiler_params,
        )(xr, pe)
    else:
        out = pl.pallas_call(
            functools.partial(_pe_add_kernel, d_model=d, fold=fold),
            out_shape=out_shape,
            grid=grid,
            in_specs=[x_spec],
            out_specs=x_spec,
            input_output_aliases=io_alias,
            compiler_params=compiler_params,
        )(xr)

    return out.reshape(b, s, d) if fold > 1 else out


# ----------------------------- reference & tests -------------------------------


def _reference(x):
    """Pure-JAX reference mirroring the PyTorch forward (learnable=False)."""
    s, d = x.shape[-2], x.shape[-1]
    position = jnp.arange(s, dtype=jnp.float32)[:, None]
    div_term = jnp.exp(jnp.arange(0, d, 2, dtype=jnp.float32) * -(math.log(10000.0) / d))
    ang = position * div_term
    pe = jnp.zeros((s, d), dtype=jnp.float32)
    pe = pe.at[:, 0::2].set(jnp.sin(ang))
    pe = pe.at[:, 1::2].set(jnp.cos(ang))
    return (x.astype(jnp.float32) + pe[None, :, :]).astype(x.dtype)


# TODO(synk): learnable=True branch is a plain learned-parameter broadcast add (torch.zeros init);
# omitted since default construction uses learnable=False sinusoidal encoding.

if __name__ == "__main__":
    key = jax.random.PRNGKey(0)
    k1, k2, k3, k4 = jax.random.split(key, 4)

    # 1) module-default small shapes: B=2 -> precomputed-PE path; D=32 -> lane folding (L=128)
    x1 = jax.random.normal(k1, (2, 8, 32), dtype=jnp.float32)
    o1 = jax.block_until_ready(positional_encoding(x1))
    assert o1.shape == x1.shape and o1.dtype == x1.dtype
    assert jnp.allclose(o1, _reference(x1), atol=1e-5, rtol=1e-5)

    # 2) in-kernel PE path, multiple evenly-divided seq tiles (exercises the per-tile pos offset)
    x2 = jax.random.normal(k2, (4, 64, 128), dtype=jnp.float32)
    o2 = jax.block_until_ready(positional_encoding(x2, target_block_bytes=64 * 1024))
    assert jnp.allclose(o2, _reference(x2), atol=1e-5, rtol=1e-5)

    # 3) non-divisible seq length: cdiv grid with a boundary tile (and a tiled batch axis)
    x3 = jax.random.normal(k3, (4, 20, 128), dtype=jnp.float32)
    o3 = jax.block_until_ready(positional_encoding(x3, target_block_bytes=8 * 1024))
    assert jnp.allclose(o3, _reference(x3), atol=1e-5, rtol=1e-5)

    # 4) bf16 fast path + lane folding + in-kernel PE recompute
    x4 = jax.random.normal(k4, (4, 32, 32), dtype=jnp.bfloat16)
    o4 = jax.block_until_ready(positional_encoding(x4))
    assert o4.shape == x4.shape and o4.dtype == jnp.bfloat16
    assert jnp.allclose(o4.astype(jnp.float32), _reference(x4).astype(jnp.float32), atol=5e-2)

    print("KERNEL_OK")
</pallas_src>

<mosaic_0001>
module attributes {stable_mosaic.version = 11 : i64} {
  func.func @_pe_table_add_kernel(%arg0: i32, %arg1: i32, %arg2: memref<2x2x128xf32, #tpu.memory_space<vmem>>, %arg3: memref<2x128xf32, #tpu.memory_space<vmem>>, %arg4: memref<2x2x128xf32, #tpu.memory_space<vmem>>) attributes {dimension_semantics = [#tpu.dimension_semantics<parallel>, #tpu.dimension_semantics<parallel>], iteration_bounds = array<i64: 1, 1>, scalar_prefetch = 0 : i64, scratch_operands = 0 : i64, tpu.core_type = #tpu.core_type<tc>, window_params = [{transform_indices = @transform_0, window_bounds = array<i64: 2, 2, 128>}, {transform_indices = @transform_1, window_bounds = array<i64: 2, 128>}, {transform_indices = @transform_2, window_bounds = array<i64: 2, 2, 128>}]} {
    %c0 = arith.constant 0 : index
    %c0_0 = arith.constant 0 : index
    %c0_1 = arith.constant 0 : index
    %0 = vector.load %arg2[%c0, %c0_0, %c0_1] : memref<2x2x128xf32, #tpu.memory_space<vmem>>, vector<2x2x128xf32>
    %c0_2 = arith.constant 0 : index
    %c0_3 = arith.constant 0 : index
    %1 = vector.load %arg3[%c0_2, %c0_3] : memref<2x128xf32, #tpu.memory_space<vmem>>, vector<2x128xf32>
    %2 = vector.shape_cast %1 : vector<2x128xf32> to vector<1x2x128xf32>
    %3 = vector.broadcast %2 : vector<1x2x128xf32> to vector<2x2x128xf32>
    %4 = arith.addf %0, %3 : vector<2x2x128xf32>
    %c0_4 = arith.constant 0 : index
    %c0_5 = arith.constant 0 : index
    %c0_6 = arith.constant 0 : index
    %5 = vector.load %arg4[%c0_4, %c0_5, %c0_6] : memref<2x2x128xf32, #tpu.memory_space<vmem>>, vector<2x2x128xf32>
    tpu.vector_store %arg4[%c0_4, %c0_5, %c0_6], %4 {strides = array<i32>} : memref<2x2x128xf32, #tpu.memory_space<vmem>>, vector<2x2x128xf32>,
    return
  }
  func.func @transform_0(%arg0: i32, %arg1: i32) -> (i32, i32, i32) {
    %c0_i32 = arith.constant 0 : i32
    %c0_i32_0 = arith.constant 0 : i32
    return %arg0, %arg1, %c0_i32 : i32, i32, i32
  }
  func.func @transform_1(%arg0: i32, %arg1: i32) -> (i32, i32) {
    %c0_i32 = arith.constant 0 : i32
    %c0_i32_0 = arith.constant 0 : i32
    return %arg1, %c0_i32 : i32, i32
  }
  func.func @transform_2(%arg0: i32, %arg1: i32) -> (i32, i32, i32) {
    %c0_i32 = arith.constant 0 : i32
    %c0_i32_0 = arith.constant 0 : i32
    return %arg0, %arg1, %c0_i32 : i32, i32, i32
  }
}

</mosaic_0001>

<llo_original>
// kernel: tpu_custom_call.1
$region0: #{tpu_custom_call.1}
  #allocation0 [shape = 'u32[]', space=smem, size = 0x4, offset = 0x4, fixed_abs, tag = 'smem constant byte address 0x4 - core index']
  #allocation1 [shape = 'u32[144,128]{1,0:T(1,128)}', space=vmem, size = 0x12000, scoped, tag = 'internal scratch']
  %s0 = inlined_call_operand.hbm [shape: f32[2,2,128], index: 0, kind: input, shape index: {}]
  %s1 = inlined_call_operand.vmem [shape: f32[2,128], index: 1, kind: input, shape index: {}]
  %s2 = inlined_call_operand.hbm [shape: f32[2,2,128], index: 2, kind: output, shape index: {}]
  %s3 = sld [smem:[#allocation0]]
  $region22: #{tpu_custom_call.1} parent=0
    _
  %s5 = ssub.s32 1, %s3
  %s6 = scalar_select 0, %s5, %s3
  $region1: #{tpu_custom_call.1} parent=0
    #allocation2 [shape = 'u8[2048]{0}', space=vmem, size = 0x800, scoped, tag = 'input window, operand 0, single buffered']
    #allocation3 [shape = 's32[1]{0}', space=sflag, size = 0x4, scoped, tag = 'scoped memory for tpu_custom_call.1']
    #allocation4 [shape = 's32[1]{0}', space=sflag, size = 0x4, scoped, tag = 'scoped memory for tpu_custom_call.1']
    #allocation5 [shape = 'u8[2048]{0}', space=vmem, size = 0x800, scoped, tag = 'output window, operand 0, single buffered']
    %7 = vsyncpa [#allocation3], 0
    %8 = vsyncpa [#allocation4], 0
    // Predicated region
    $region2: #{tpu_custom_call.1} parent=1 // pred_check
      _
    $region3: #{tpu_custom_call.1} parent=1 // pred_check_branch
      %10 = sbr.rel (0) target = $region5
    $region4: #{tpu_custom_call.1} parent=1 // pred_region
      %s12 = ssub.s32 64, 64
      %13 = vsyncadd [#allocation3], %s12
      %s14 = sshll.u32 [#allocation2], 4
      %s15 = int_to_ptr.vmem [resolvable:$true] %s14
      %20 = dma.hbm_to_vmem [thread:$0]  %s0, 64, %s15, [#allocation3], 32, 32, 2
    $region5: #{tpu_custom_call.1} parent=1 // pred_fallthru
      _
    // Predicated region
    $region6: #{tpu_custom_call.1} parent=1 // pred_check
      _
    $region7: #{tpu_custom_call.1} parent=1 // pred_check_branch
      %22 = sbr.rel (0) target = $region9
    $region8: #{tpu_custom_call.1} parent=1 // pred_region
      _
    $region9: #{tpu_custom_call.1} parent=1 // pred_fallthru
      _
    // Predicated region
    $region10: #{tpu_custom_call.1} parent=1 // pred_check
      _
    $region11: #{tpu_custom_call.1} parent=1 // pred_check_branch
      %24 = sbr.rel (0) target = $region13
    $region12: #{tpu_custom_call.1} parent=1 // pred_region
      %25 = dma.done [#allocation3], 64
    $region13: #{tpu_custom_call.1} parent=1 // pred_fallthru
      _
    %v26 = vld [vmem:[#allocation2] sm:$0x3]
    %v27 = vld [vmem:[#allocation2 + $0x2] sm:$0x3]
    %v28 = vld [vmem:[%s1] sm:$0x3]
    %v29 = vadd.f32 %v26, %v28
    %v30 = vadd.f32 %v27, %v28
    %31 = vst [vmem:[#allocation5] sm:$0x3] %v29
    %32 = vst [vmem:[#allocation5 + $0x2] sm:$0x3] %v30
    // Predicated region
    $region14: #{tpu_custom_call.1} parent=1 // pred_check
      _
    $region15: #{tpu_custom_call.1} parent=1 // pred_check_branch
      %34 = sbr.rel (0) target = $region17
    $region16: #{tpu_custom_call.1} parent=1 // pred_region
      %s36 = ssub.s32 64, 64
      %37 = vsyncadd [#allocation4], %s36
      %s38 = sshll.u32 [#allocation5], 4
      %s39 = int_to_ptr.vmem [resolvable:$true] %s38
      %44 = dma.vmem_to_hbm [thread:$0]  %s39, 64, %s2, [#allocation4], 32, 32, 2
    $region17: #{tpu_custom_call.1} parent=1 // pred_fallthru
      _
    // Predicated region
    $region18: #{tpu_custom_call.1} parent=1 // pred_check
      _
    $region19: #{tpu_custom_call.1} parent=1 // pred_check_branch
      %46 = sbr.rel (0) target = $region21
    $region20: #{tpu_custom_call.1} parent=1 // pred_region
      %47 = dma.done [#allocation4], 64
    $region21: #{tpu_custom_call.1} parent=1 // pred_fallthru
      _
    %48 = vsyncpa [#allocation3], 1
    %49 = vsyncpa [#allocation4], 1

</llo_original>
